<compile_context>
chip_gen: v5e
topology: v5e:2x2
jax: 0.10.0
libtpu: 0.0.40
codegen_flags: <defaults>
</compile_context>

<pallas_src>
import jax
import jax.numpy as jnp
from jax.experimental import pallas as pl
from jax.experimental.pallas import tpu as pltpu


def _make_layernorm_kernel(eps, n_per_sample):
    inv_n = 1.0 / float(n_per_sample)
    inv_nm1 = 1.0 / float(max(n_per_sample - 1, 1))  # unbiased (Bessel) estimator

    def kernel(x_ref, g_ref, b_ref, o_ref):
        x = x_ref[...].astype(jnp.float32)                     # (Bn, C, HW)

        # Single pass: per-sample sum and sum of squares (chained reductions).
        s1 = jnp.sum(jnp.sum(x, axis=2, keepdims=True), axis=1, keepdims=True)
        s2 = jnp.sum(jnp.sum(x * x, axis=2, keepdims=True), axis=1, keepdims=True)
        mean = s1 * inv_n                                      # (Bn, 1, 1)
        var = jnp.maximum((s2 - s1 * mean) * inv_nm1, 0.0)     # guard cancellation
        std = jnp.sqrt(var)
        inv = 1.0 / (std + eps)                                # per-sample scalar only

        # Fold normalization + per-channel affine into a single FMA per element.
        g = g_ref[...][None, :, :]                             # (1, C, 1)
        b = b_ref[...][None, :, :]                             # (1, C, 1)
        scale = g * inv                                        # (Bn, C, 1)
        bias = b - mean * scale                                # (Bn, C, 1)
        o_ref[...] = (x * scale + bias).astype(o_ref.dtype)

    return kernel


def _pick_block_n(n, bytes_per_sample, target_bytes=2 << 20):
    """Largest divisor of n whose input block stays <= target_bytes."""
    bn = 1
    for cand in range(1, n + 1):
        if n % cand == 0 and cand * bytes_per_sample <= target_bytes:
            bn = cand
    return bn


def layer_norm(x, gamma=None, beta=None, *, eps=1e-5, affine=True):
    """x: (N, C, H, W); gamma/beta: (C,). Matches the PyTorch module forward."""
    N, C, H, W = x.shape
    HW = H * W
    x2 = x.reshape(N, C, HW)

    if affine:
        g2 = gamma.reshape(C, 1).astype(jnp.float32)
        b2 = beta.reshape(C, 1).astype(jnp.float32)
    else:
        g2 = jnp.ones((C, 1), jnp.float32)
        b2 = jnp.zeros((C, 1), jnp.float32)

    bytes_per_sample = C * HW * x.dtype.itemsize
    Bn = _pick_block_n(N, bytes_per_sample)
    grid = (N // Bn,)

    # VMEM budget: double-buffered in+out blocks + f32 intermediates + headroom.
    block_bytes = Bn * bytes_per_sample
    f32_block = Bn * C * HW * 4
    vmem_limit = int(min(max(4 * block_bytes + 3 * f32_block + (2 << 20), 8 << 20),
                         48 << 20))

    kernel = _make_layernorm_kernel(eps, C * HW)

    out = pl.pallas_call(
        kernel,
        out_shape=jax.ShapeDtypeStruct((N, C, HW), x.dtype),
        grid_spec=pltpu.PrefetchScalarGridSpec(
            num_scalar_prefetch=0,
            grid=grid,
            in_specs=[
                pl.BlockSpec((Bn, C, HW), lambda i: (i, 0, 0)),
                pl.BlockSpec((C, 1), lambda i: (0, 0)),
                pl.BlockSpec((C, 1), lambda i: (0, 0)),
            ],
            out_specs=pl.BlockSpec((Bn, C, HW), lambda i: (i, 0, 0)),
        ),
        compiler_params=pltpu.CompilerParams(
            dimension_semantics=("parallel",),
            vmem_limit_bytes=vmem_limit,
        ),
    )(x2, g2, b2)

    return out.reshape(N, C, H, W)


if __name__ == "__main__":
    key = jax.random.PRNGKey(0)
    k_x, k_g = jax.random.split(key)

    N, C, H, W = 2, 4, 16, 16
    x = jax.random.normal(k_x, (N, C, H, W), dtype=jnp.float32)

    # Deterministic parameter init mirroring the module's __init__:
    #   gamma ~ uniform(0, 1), beta = zeros
    gamma = jax.random.uniform(k_g, (C,), dtype=jnp.float32)
    beta = jnp.zeros((C,), dtype=jnp.float32)

    y = layer_norm(x, gamma, beta, eps=1e-5, affine=True)
    jax.block_until_ready(y)

    # Pure-JAX reference (same math as the PyTorch forward).
    xf = x.reshape(N, -1)
    mean = xf.mean(axis=1).reshape(N, 1, 1, 1)
    std = jnp.sqrt(((xf - xf.mean(axis=1, keepdims=True)) ** 2).sum(axis=1)
                   / (xf.shape[1] - 1)).reshape(N, 1, 1, 1)
    y_ref = (x - mean) / (std + 1e-5)
    y_ref = gamma.reshape(1, C, 1, 1) * y_ref + beta.reshape(1, C, 1, 1)
    err = float(jnp.max(jnp.abs(y - y_ref)))
    assert jnp.allclose(y, y_ref, atol=1e-4, rtol=1e-4), err

    print("KERNEL_OK")
</pallas_src>

<mosaic_0001>
module attributes {stable_mosaic.version = 11 : i64} {
  func.func @kernel(%arg0: i32, %arg1: memref<2x4x256xf32, #tpu.memory_space<vmem>>, %arg2: memref<4x1xf32, #tpu.memory_space<vmem>>, %arg3: memref<4x1xf32, #tpu.memory_space<vmem>>, %arg4: memref<2x4x256xf32, #tpu.memory_space<vmem>>) attributes {dimension_semantics = [#tpu.dimension_semantics<parallel>], iteration_bounds = array<i64: 1>, scalar_prefetch = 0 : i64, scratch_operands = 0 : i64, tpu.core_type = #tpu.core_type<tc>, window_params = [{transform_indices = @transform_0, window_bounds = array<i64: 2, 4, 256>}, {pipeline_mode = #tpu.pipeline_mode<synchronous>, transform_indices = @transform_1, window_bounds = array<i64: 4, 1>}, {pipeline_mode = #tpu.pipeline_mode<synchronous>, transform_indices = @transform_2, window_bounds = array<i64: 4, 1>}, {transform_indices = @transform_3, window_bounds = array<i64: 2, 4, 256>}]} {
    %c0 = arith.constant 0 : index
    %c0_0 = arith.constant 0 : index
    %c0_1 = arith.constant 0 : index
    %0 = vector.load %arg1[%c0, %c0_0, %c0_1] : memref<2x4x256xf32, #tpu.memory_space<vmem>>, vector<2x4x256xf32>
    %cst = arith.constant dense<0.000000e+00> : vector<2x4xf32>
    %1 = vector.multi_reduction <add>, %0, %cst [2] : vector<2x4x256xf32> to vector<2x4xf32>
    %2 = vector.shape_cast %1 : vector<2x4xf32> to vector<2x4x1xf32>
    %cst_2 = arith.constant dense<0.000000e+00> : vector<2x1xf32>
    %3 = vector.multi_reduction <add>, %2, %cst_2 [1] : vector<2x4x1xf32> to vector<2x1xf32>
    %4 = vector.shape_cast %3 : vector<2x1xf32> to vector<2x1x1xf32>
    %5 = arith.mulf %0, %0 : vector<2x4x256xf32>
    %cst_3 = arith.constant dense<0.000000e+00> : vector<2x4xf32>
    %6 = vector.multi_reduction <add>, %5, %cst_3 [2] : vector<2x4x256xf32> to vector<2x4xf32>
    %7 = vector.shape_cast %6 : vector<2x4xf32> to vector<2x4x1xf32>
    %cst_4 = arith.constant dense<0.000000e+00> : vector<2x1xf32>
    %8 = vector.multi_reduction <add>, %7, %cst_4 [1] : vector<2x4x1xf32> to vector<2x1xf32>
    %9 = vector.shape_cast %8 : vector<2x1xf32> to vector<2x1x1xf32>
    %cst_5 = arith.constant 9.765625E-4 : f32
    %10 = vector.broadcast %cst_5 : f32 to vector<2x1x1xf32>
    %11 = arith.mulf %4, %10 : vector<2x1x1xf32>
    %12 = arith.mulf %4, %11 : vector<2x1x1xf32>
    %13 = arith.subf %9, %12 : vector<2x1x1xf32>
    %cst_6 = arith.constant 9.77517105E-4 : f32
    %14 = vector.broadcast %cst_6 : f32 to vector<2x1x1xf32>
    %15 = arith.mulf %13, %14 : vector<2x1x1xf32>
    %cst_7 = arith.constant 0.000000e+00 : f32
    %16 = vector.broadcast %cst_7 : f32 to vector<2x1x1xf32>
    %17 = arith.maximumf %15, %16 : vector<2x1x1xf32>
    %18 = math.sqrt %17 : vector<2x1x1xf32>
    %cst_8 = arith.constant 9.99999974E-6 : f32
    %19 = vector.broadcast %cst_8 : f32 to vector<2x1x1xf32>
    %20 = arith.addf %18, %19 : vector<2x1x1xf32>
    %cst_9 = arith.constant 1.000000e+00 : f32
    %21 = vector.broadcast %cst_9 : f32 to vector<2x1x1xf32>
    %22 = arith.divf %21, %20 : vector<2x1x1xf32>
    %c0_10 = arith.constant 0 : index
    %c0_11 = arith.constant 0 : index
    %23 = vector.load %arg2[%c0_10, %c0_11] : memref<4x1xf32, #tpu.memory_space<vmem>>, vector<4x1xf32>
    %24 = vector.shape_cast %23 : vector<4x1xf32> to vector<1x4x1xf32>
    %c0_12 = arith.constant 0 : index
    %c0_13 = arith.constant 0 : index
    %25 = vector.load %arg3[%c0_12, %c0_13] : memref<4x1xf32, #tpu.memory_space<vmem>>, vector<4x1xf32>
    %26 = vector.shape_cast %25 : vector<4x1xf32> to vector<1x4x1xf32>
    %27 = vector.broadcast %24 : vector<1x4x1xf32> to vector<2x4x1xf32>
    %28 = vector.broadcast %22 : vector<2x1x1xf32> to vector<2x4x1xf32>
    %29 = arith.mulf %27, %28 : vector<2x4x1xf32>
    %30 = vector.broadcast %11 : vector<2x1x1xf32> to vector<2x4x1xf32>
    %31 = arith.mulf %30, %29 : vector<2x4x1xf32>
    %32 = vector.broadcast %26 : vector<1x4x1xf32> to vector<2x4x1xf32>
    %33 = arith.subf %32, %31 : vector<2x4x1xf32>
    %34 = vector.broadcast %29 : vector<2x4x1xf32> to vector<2x4x256xf32>
    %35 = arith.mulf %0, %34 : vector<2x4x256xf32>
    %36 = vector.broadcast %33 : vector<2x4x1xf32> to vector<2x4x256xf32>
    %37 = arith.addf %35, %36 : vector<2x4x256xf32>
    %c0_14 = arith.constant 0 : index
    %c0_15 = arith.constant 0 : index
    %c0_16 = arith.constant 0 : index
    %38 = vector.load %arg4[%c0_14, %c0_15, %c0_16] : memref<2x4x256xf32, #tpu.memory_space<vmem>>, vector<2x4x256xf32>
    tpu.vector_store %arg4[%c0_14, %c0_15, %c0_16], %37 {strides = array<i32>} : memref<2x4x256xf32, #tpu.memory_space<vmem>>, vector<2x4x256xf32>,
    return
  }
  func.func @transform_0(%arg0: i32) -> (i32, i32, i32) {
    %c0_i32 = arith.constant 0 : i32
    %c0_i32_0 = arith.constant 0 : i32
    %c0_i32_1 = arith.constant 0 : i32
    return %arg0, %c0_i32, %c0_i32_0 : i32, i32, i32
  }
  func.func @transform_1(%arg0: i32) -> (i32, i32) {
    %c0_i32 = arith.constant 0 : i32
    %c0_i32_0 = arith.constant 0 : i32
    %c0_i32_1 = arith.constant 0 : i32
    return %c0_i32, %c0_i32_0 : i32, i32
  }
  func.func @transform_2(%arg0: i32) -> (i32, i32) {
    %c0_i32 = arith.constant 0 : i32
    %c0_i32_0 = arith.constant 0 : i32
    %c0_i32_1 = arith.constant 0 : i32
    return %c0_i32, %c0_i32_0 : i32, i32
  }
  func.func @transform_3(%arg0: i32) -> (i32, i32, i32) {
    %c0_i32 = arith.constant 0 : i32
    %c0_i32_0 = arith.constant 0 : i32
    %c0_i32_1 = arith.constant 0 : i32
    return %arg0, %c0_i32, %c0_i32_0 : i32, i32, i32
  }
}

</mosaic_0001>

<llo_original>
// kernel: tpu_custom_call.1
$region0: #{tpu_custom_call.1}
  #allocation0 [shape = 'u32[]', space=smem, size = 0x4, offset = 0x4, fixed_abs, tag = 'smem constant byte address 0x4 - core index']
  #allocation1 [shape = 'u32[72,128]{1,0:T(1,128)}', space=vmem, size = 0x9000, scoped, tag = 'internal scratch']
  %s0 = inlined_call_operand.hbm [shape: f32[2,4,256], index: 0, kind: input, shape index: {}]
  %s1 = inlined_call_operand.vmem [shape: f32[4,1], index: 1, kind: input, shape index: {}]
  %s2 = inlined_call_operand.vmem [shape: f32[4,1], index: 2, kind: input, shape index: {}]
  %s3 = inlined_call_operand.hbm [shape: f32[2,4,256], index: 3, kind: output, shape index: {}]
  %s4 = sld [smem:[#allocation0]]
  $region26: #{tpu_custom_call.1} parent=0
    _
  %s6 = ssub.s32 1, %s4
  %s7 = scalar_select 0, %s6, %s4
  $region1: #{tpu_custom_call.1} parent=0
    #allocation2 [shape = 'u8[8192]{0}', space=vmem, size = 0x2000, scoped, tag = 'input window, operand 0, single buffered']
    #allocation3 [shape = 's32[1]{0}', space=sflag, size = 0x4, scoped, tag = 'scoped memory for tpu_custom_call.1']
    #allocation4 [shape = 's32[1]{0}', space=sflag, size = 0x4, scoped, tag = 'scoped memory for tpu_custom_call.1']
    #allocation5 [shape = 'u8[8192]{0}', space=vmem, size = 0x2000, scoped, tag = 'output window, operand 0, single buffered']
    %8 = vsyncpa [#allocation3], 0
    %9 = vsyncpa [#allocation4], 0
    // Predicated region
    $region2: #{tpu_custom_call.1} parent=1 // pred_check
      _
    $region3: #{tpu_custom_call.1} parent=1 // pred_check_branch
      %11 = sbr.rel (0) target = $region5
    $region4: #{tpu_custom_call.1} parent=1 // pred_region
      %13 = vsyncadd [#allocation3], 0
      %s14 = sshll.u32 %s0, 4
      %s15 = int_to_ptr.hbm [resolvable:$true] %s14
      %s16 = sshll.u32 [#allocation2], 4
      %s17 = int_to_ptr.vmem [resolvable:$true] %s16
      %22 = dma.hbm_to_vmem [thread:$0]  %s15, 256, %s17, [#allocation3], 128, 128, 8
    $region5: #{tpu_custom_call.1} parent=1 // pred_fallthru
      _
    // Predicated region
    $region6: #{tpu_custom_call.1} parent=1 // pred_check
      _
    $region7: #{tpu_custom_call.1} parent=1 // pred_check_branch
      %24 = sbr.rel (0) target = $region9
    $region8: #{tpu_custom_call.1} parent=1 // pred_region
      _
    $region9: #{tpu_custom_call.1} parent=1 // pred_fallthru
      _
    // Predicated region
    $region10: #{tpu_custom_call.1} parent=1 // pred_check
      _
    $region11: #{tpu_custom_call.1} parent=1 // pred_check_branch
      %26 = sbr.rel (0) target = $region13
    $region12: #{tpu_custom_call.1} parent=1 // pred_region
      _
    $region13: #{tpu_custom_call.1} parent=1 // pred_fallthru
      _
    // Predicated region
    $region14: #{tpu_custom_call.1} parent=1 // pred_check
      _
    $region15: #{tpu_custom_call.1} parent=1 // pred_check_branch
      %28 = sbr.rel (0) target = $region17
    $region16: #{tpu_custom_call.1} parent=1 // pred_region
      %30 = dma.done [#allocation3], 256
    $region17: #{tpu_custom_call.1} parent=1 // pred_fallthru
      _
    %v31 = vld [vmem:[#allocation2] sm:$0xff]
    %v32 = vld [vmem:[#allocation2 + $0x8] sm:$0xff]
    %35 = vst [vmem:[#allocation1] ss:$2 sm:$0xff] %v31
    %v36 = vld.sshfl [vmem:[#allocation1] sm:$0xff pattern:$0x75316420]
    %v37 = vld.sshfl [vmem:[#allocation1 + $0x8] sm:$0xff pattern:$0x75316420]
    %s38 = scalar_lea.vmem [#allocation1], 16
    %39 = vst [vmem:[%s38] ss:$2 sm:$0xff] %v32
    %v40 = vld.sshfl [vmem:[#allocation1 + $0x10] sm:$0xff pattern:$0x75316420]
    %v41 = vld.sshfl [vmem:[#allocation1 + $0x18] sm:$0xff pattern:$0x75316420]
    %vm46 = vcmask 1043456
    %v47 = vsel %vm46, %v36, 0.0
    %v48 = vsel %vm46, %v37, 0.0
    %v49 = vadd.f32 %v47, %v48
    %50 = vadd.xlane.f32.xlu0 %v49
    %v51 = vpop.xlane.xlu0 %50
    %v52 = vsel %vm46, %v40, 0.0
    %v53 = vsel %vm46, %v41, 0.0
    %v54 = vadd.f32 %v52, %v53
    %55 = vadd.xlane.f32.xlu0 %v54
    %v56 = vpop.xlane.xlu0 %55
    %v57 = vsel %vm46, %v51, 0.0
    %v58 = vrot.slane %v57, 4
    %v59 = vadd.f32 %v57, %v58
    %v60 = vrot.slane %v59, 2
    %v61 = vadd.f32 %v59, %v60
    %v62 = vrot.slane %v61, 1
    %v63 = vadd.f32 %v61, %v62
    %v64 = vsel %vm46, %v56, 0.0
    %v65 = vrot.slane %v64, 4
    %v66 = vadd.f32 %v64, %v65
    %v67 = vrot.slane %v66, 2
    %v68 = vadd.f32 %v66, %v67
    %v69 = vrot.slane %v68, 1
    %v70 = vadd.f32 %v68, %v69
    %v71 = vmul.f32 %v31, %v31
    %v72 = vmul.f32 %v32, %v32
    %75 = vst [vmem:[#allocation1] ss:$2 sm:$0xff] %v71
    %v76 = vld.sshfl [vmem:[#allocation1] sm:$0xff pattern:$0x75316420]
    %v77 = vld.sshfl [vmem:[#allocation1 + $0x8] sm:$0xff pattern:$0x75316420]
    %s78 = scalar_lea.vmem [#allocation1], 16
    %79 = vst [vmem:[%s78] ss:$2 sm:$0xff] %v72
    %v80 = vld.sshfl [vmem:[#allocation1 + $0x10] sm:$0xff pattern:$0x75316420]
    %v81 = vld.sshfl [vmem:[#allocation1 + $0x18] sm:$0xff pattern:$0x75316420]
    %v86 = vsel %vm46, %v76, 0.0
    %v87 = vsel %vm46, %v77, 0.0
    %v88 = vadd.f32 %v86, %v87
    %89 = vadd.xlane.f32.xlu0 %v88
    %v90 = vpop.xlane.xlu0 %89
    %v91 = vsel %vm46, %v80, 0.0
    %v92 = vsel %vm46, %v81, 0.0
    %v93 = vadd.f32 %v91, %v92
    %94 = vadd.xlane.f32.xlu0 %v93
    %v95 = vpop.xlane.xlu0 %94
    %v96 = vsel %vm46, %v90, 0.0
    %v97 = vrot.slane %v96, 4
    %v98 = vadd.f32 %v96, %v97
    %v99 = vrot.slane %v98, 2
    %v100 = vadd.f32 %v98, %v99
    %v101 = vrot.slane %v100, 1
    %v102 = vadd.f32 %v100, %v101
    %v103 = vsel %vm46, %v95, 0.0
    %v104 = vrot.slane %v103, 4
    %v105 = vadd.f32 %v103, %v104
    %v106 = vrot.slane %v105, 2
    %v107 = vadd.f32 %v105, %v106
    %v108 = vrot.slane %v107, 1
    %v109 = vadd.f32 %v107, %v108
    %v110 = vmul.f32 %v63, 0.0009765625
    %v111 = vmul.f32 %v70, 0.0009765625
    %v112 = vmul.f32 %v63, %v110
    %v113 = vmul.f32 %v70, %v111
    %v114 = vsub.f32 %v102, %v112
    %v115 = vsub.f32 %v109, %v113
    %v116 = vmul.f32 %v114, 0.0009775171
    %v117 = vmul.f32 %v115, 0.0009775171
    %v118 = vmax.f32 %v116, 0.0
    %v119 = vmax.f32 %v117, 0.0
    %v120 = vrsqrt.pop %v118
    %v121 = vmul.f32 %v120, %v118
    %v122 = vmul.f32 %v121, %v120
    %v123 = vmul.f32 0.5, %v122
    %v124 = vsub.f32 1.5, %v123
    %v125 = vmul.f32 %v120, %v124
    %v126 = vmul.f32 %v118, %v125
    %vm127 = vcmp.eq.f32.partialorder %v118, inf
    %v128 = vsel %vm127, %v118, %v126
    %vm129 = vcmp.eq.f32.partialorder %v118, 0.0
    %v130 = vand.u32 %v118, 2147483648
    %v131 = vsel %vm129, %v130, %v128
    %v132 = vrsqrt.pop %v119
    %v133 = vmul.f32 %v132, %v119
    %v134 = vmul.f32 %v133, %v132
    %v135 = vmul.f32 0.5, %v134
    %v136 = vsub.f32 1.5, %v135
    %v137 = vmul.f32 %v132, %v136
    %v138 = vmul.f32 %v119, %v137
    %vm139 = vcmp.eq.f32.partialorder %v119, inf
    %v140 = vsel %vm139, %v119, %v138
    %vm141 = vcmp.eq.f32.partialorder %v119, 0.0
    %v142 = vand.u32 %v119, 2147483648
    %v143 = vsel %vm141, %v142, %v140
    %v144 = vadd.f32 %v131, 1e-05
    %v145 = vadd.f32 %v143, 1e-05
    %v146 = vrcp.pop %v144
    %v147 = vmul.f32 %v144, %v146
    %v148 = vsub.f32 1.0, %v147
    %v149 = vmul.f32 %v146, %v148
    %v150 = vadd.f32 %v146, %v149
    %vm151 = vweird.f32 %v144
    %vm152 = vweird.f32 %v146
    %vm153 = vmor %vm151, %vm152
    %v154 = vsel %vm153, %v146, %v150
    %v155 = vand.u32 2147483647, %v144
    %vm156 = vcmp.eq.f32.partialorder %v155, 8.507059e+37
    %v157 = vand.u32 %v144, 2147483648
    %v158 = vor.u32 1.1754944e-38, %v157
    %v159 = vsel %vm156, %v158, %v154
    %v160 = vmul.f32 1.0, %v159
    %v161 = vrcp.pop %v145
    %v162 = vmul.f32 %v145, %v161
    %v163 = vsub.f32 1.0, %v162
    %v164 = vmul.f32 %v161, %v163
    %v165 = vadd.f32 %v161, %v164
    %vm166 = vweird.f32 %v145
    %vm167 = vweird.f32 %v161
    %vm168 = vmor %vm166, %vm167
    %v169 = vsel %vm168, %v161, %v165
    %v170 = vand.u32 2147483647, %v145
    %vm171 = vcmp.eq.f32.partialorder %v170, 8.507059e+37
    %v172 = vand.u32 %v145, 2147483648
    %v173 = vor.u32 1.1754944e-38, %v172
    %v174 = vsel %vm171, %v173, %v169
    %v175 = vmul.f32 1.0, %v174
    %v176 = vld [vmem:[%s1] sm:$0xf]
    %v177 = vld [vmem:[%s2] sm:$0xf]
    %v178 = vmul.f32 %v176, %v160
    %v179 = vmul.f32 %v176, %v175
    %v180 = vmul.f32 %v110, %v178
    %v181 = vmul.f32 %v111, %v179
    %v182 = vsub.f32 %v177, %v180
    %v183 = vsub.f32 %v177, %v181
    %185 = vset.pattern.permute.xlu0 0
    %186 = vperm.xlu0 %185, %v178
    %v187 = vpop.permute.xlu0 %186
    %189 = vset.pattern.permute.xlu0 0
    %190 = vperm.xlu0 %189, %v179
    %v191 = vpop.permute.xlu0 %190
    %v193 = vunpack.c.l.s4 839922192
    %v194 = vunpack.c.0.s8 %v193
    %v195 = vperm.slane %v187, %v194
    %v197 = vunpack.c.l.s4 839922192
    %v198 = vunpack.c.0.s8 %v197
    %v199 = vperm.slane %v191, %v198
    %v202 = vmul.f32 %v31, %v195
    %v203 = vmul.f32 %v32, %v199
    %205 = vset.pattern.permute.xlu0 0
    %206 = vperm.xlu0 %205, %v182
    %v207 = vpop.permute.xlu0 %206
    %209 = vset.pattern.permute.xlu0 0
    %210 = vperm.xlu0 %209, %v183
    %v211 = vpop.permute.xlu0 %210
    %v213 = vunpack.c.l.s4 839922192
    %v214 = vunpack.c.0.s8 %v213
    %v215 = vperm.slane %v207, %v214
    %v217 = vunpack.c.l.s4 839922192
    %v218 = vunpack.c.0.s8 %v217
    %v219 = vperm.slane %v211, %v218
    %v222 = vadd.f32 %v202, %v215
    %v223 = vadd.f32 %v203, %v219
    %224 = vst [vmem:[#allocation5] sm:$0xff] %v222
    %225 = vst [vmem:[#allocation5 + $0x8] sm:$0xff] %v223
    // Predicated region
    $region18: #{tpu_custom_call.1} parent=1 // pred_check
      _
    $region19: #{tpu_custom_call.1} parent=1 // pred_check_branch
      %227 = sbr.rel (0) target = $region21
    $region20: #{tpu_custom_call.1} parent=1 // pred_region
      %229 = vsyncadd [#allocation4], 0
      %s230 = sshll.u32 [#allocation5], 4
      %s231 = int_to_ptr.vmem [resolvable:$true] %s230
      %s232 = sshll.u32 %s3, 4
      %s233 = int_to_ptr.hbm [resolvable:$true] %s232
      %238 = dma.vmem_to_hbm [thread:$0]  %s231, 256, %s233, [#allocation4], 128, 128, 8
    $region21: #{tpu_custom_call.1} parent=1 // pred_fallthru
      _
    // Predicated region
    $region22: #{tpu_custom_call.1} parent=1 // pred_check
      _
    $region23: #{tpu_custom_call.1} parent=1 // pred_check_branch
      %240 = sbr.rel (0) target = $region25
    $region24: #{tpu_custom_call.1} parent=1 // pred_region
      %242 = dma.done [#allocation4], 256
    $region25: #{tpu_custom_call.1} parent=1 // pred_fallthru
      _
    %243 = vsyncpa [#allocation3], 1
    %244 = vsyncpa [#allocation4], 1

</llo_original>
